<compile_context>
chip_gen: v7x
topology: tpu7x:2x2x1
jax: 0.10.0
libtpu: 0.0.40
codegen_flags: <defaults>
</compile_context>

<pallas_src>
import jax
import jax.numpy as jnp
from jax.experimental import pallas as pl
from jax.experimental.pallas import tpu as pltpu

# ---------------- config (small synthetic sizes) ----------------
BATCH        = 16
INPUT_SIZE   = 16
HIDDEN_SIZE  = 32
OUTPUT_SIZE  = 8
NUM_RES_DNN  = 2
NUM_DNN      = 2
LN_EPS       = 1e-5

H_PAD        = 128          # lane-dense hidden width
OUT_PAD      = 128          # lane-dense output width
L            = NUM_RES_DNN * NUM_DNN

# Flag: store matmul weights as bf16 (halves weight DMA, single-pass MXU matmuls).
# Default False to keep exact 1e-4 parity with the f32 reference.
USE_BF16_WEIGHTS = False

# --- packed weight slab layout (rows, all offsets are multiples of 8) ---
PREP_W_OFF = 0                              # rows [0, INPUT_SIZE)
DNN_W_OFF  = INPUT_SIZE                     # layer l at [DNN_W_OFF + l*H_PAD, ...)
CLS_W_OFF  = DNN_W_OFF + L * H_PAD          # rows [CLS_W_OFF, CLS_W_OFF + H_PAD)
W_ROWS     = CLS_W_OFF + H_PAD              # 16 + 4*128 + 128 = 656

# --- packed row-param slab layout (each entry is one (1, 128) row) ---
ROW_PREP_B = 0
ROW_DNN_B  = ROW_PREP_B + 1                 # L rows
ROW_DNN_G  = ROW_DNN_B + L                  # L rows
ROW_DNN_BE = ROW_DNN_G + L                  # L rows
ROW_RES_G  = ROW_DNN_BE + L                 # NUM_RES_DNN rows
ROW_RES_BE = ROW_RES_G + NUM_RES_DNN        # NUM_RES_DNN rows
ROW_CLS_B  = ROW_RES_BE + NUM_RES_DNN       # 1 row
P_ROWS     = ROW_CLS_B + 1                  # 18
P_ROWS_PAD = ((P_ROWS + 7) // 8) * 8        # 24 (sublane-aligned)

# TODO(synk): dropout is a no-op here (eval semantics); training-mode RNG masks not implemented.


# ---------------- kernel ----------------
def _ln(v, gamma, beta):
    """LayerNorm over the HIDDEN_SIZE valid lanes of a (B, H_PAD) tile.

    Uses var = E[v^2] - mu^2 so the two lane reductions are independent (no
    serialized reduce -> center -> reduce chain) and no lane mask is needed:
    padded lanes of `v` are exactly 0, and gamma/beta are zero-padded, so
    padded output lanes are (0 - mu) * rsqrt(..) * 0 + 0 == 0."""
    inv_n = 1.0 / HIDDEN_SIZE
    s1 = jnp.sum(v, axis=-1, keepdims=True)
    s2 = jnp.sum(v * v, axis=-1, keepdims=True)
    mu = s1 * inv_n
    var = s2 * inv_n - mu * mu
    return (v - mu) * jax.lax.rsqrt(var + LN_EPS) * gamma + beta


def res_dnn_kernel(x_ref, w_ref, p_ref, out_ref):
    x = x_ref[...].astype(jnp.float32)
    P = p_ref[...].astype(jnp.float32)          # (P_ROWS_PAD, 128), single load

    def row(i):                                  # (1, 128) parameter row
        return P[i:i + 1, :]

    def matmul(h, w):
        # When weights are bf16, cast the activation operand too (bf16 MXU pass);
        # accumulate/stay in f32 either way.
        return jnp.dot(h.astype(w.dtype), w, preferred_element_type=jnp.float32)

    # prepare: Linear(input_size, hidden_size) -- weight pre-transposed to (in, H_PAD)
    prep_w = w_ref[PREP_W_OFF:PREP_W_OFF + INPUT_SIZE, :]
    h = matmul(x, prep_w) + row(ROW_PREP_B)

    idx = 0
    for r in range(NUM_RES_DNN):
        shortcut = h
        for _ in range(NUM_DNN):
            off = DNN_W_OFF + idx * H_PAD
            w = w_ref[off:off + H_PAD, :]        # (H_PAD, H_PAD), 8-row aligned slice
            h = matmul(h, w) + row(ROW_DNN_B + idx)
            # dropout -> identity (eval semantics)
            h = jnp.tanh(h)
            h = _ln(h, row(ROW_DNN_G + idx), row(ROW_DNN_BE + idx))
            idx += 1
        h = jnp.tanh(shortcut + h)
        h = _ln(h, row(ROW_RES_G + r), row(ROW_RES_BE + r))

    # classifier: Linear(hidden_size, output_size) -- lane-dense padded output
    cls_w = w_ref[CLS_W_OFF:CLS_W_OFF + H_PAD, :]
    out = matmul(h, cls_w) + row(ROW_CLS_B)
    out_ref[...] = out.astype(out_ref.dtype)


# ---------------- wrapper ----------------
def res_dnn_forward(x, packed_params):
    B = x.shape[0]
    w_slab, p_slab = packed_params

    in_specs = [
        pl.BlockSpec((B, INPUT_SIZE), lambda i: (0, 0)),          # x
        pl.BlockSpec((W_ROWS, H_PAD), lambda i: (0, 0)),          # packed weights
        pl.BlockSpec((P_ROWS_PAD, H_PAD), lambda i: (0, 0)),      # packed row params
    ]
    out_spec = pl.BlockSpec((B, OUT_PAD), lambda i: (0, 0))

    out_padded = pl.pallas_call(
        res_dnn_kernel,
        out_shape=jax.ShapeDtypeStruct((B, OUT_PAD), jnp.float32),
        grid_spec=pltpu.PrefetchScalarGridSpec(
            num_scalar_prefetch=0,
            grid=(1,),                           # single fused pass
            in_specs=in_specs,
            out_specs=out_spec,
        ),
        compiler_params=pltpu.CompilerParams(
            dimension_semantics=("arbitrary",)),
    )(x, w_slab, p_slab)

    return out_padded[:, :OUTPUT_SIZE]


# ---------------- parameter construction ----------------
def init_params(key):
    """Deterministic synthetic parameters in PyTorch layout (W: (out, in))."""
    keys = jax.random.split(key, 6)

    def lin_init(k, out_f, in_f):
        bound = 1.0 / jnp.sqrt(in_f)
        kw, kb = jax.random.split(k)
        w = jax.random.uniform(kw, (out_f, in_f), jnp.float32, -bound, bound)
        b = jax.random.uniform(kb, (out_f,), jnp.float32, -bound, bound)
        return w, b

    prep_w, prep_b = lin_init(keys[0], HIDDEN_SIZE, INPUT_SIZE)

    dnn_keys = jax.random.split(keys[1], L)
    dnn_w = jnp.stack([lin_init(k, HIDDEN_SIZE, HIDDEN_SIZE)[0] for k in dnn_keys])
    dnn_b = jnp.stack([lin_init(k, HIDDEN_SIZE, HIDDEN_SIZE)[1] for k in dnn_keys])
    dnn_g = jnp.ones((L, HIDDEN_SIZE), jnp.float32)
    dnn_be = jnp.zeros((L, HIDDEN_SIZE), jnp.float32)

    res_g = jnp.ones((NUM_RES_DNN, HIDDEN_SIZE), jnp.float32)
    res_be = jnp.zeros((NUM_RES_DNN, HIDDEN_SIZE), jnp.float32)

    cls_w, cls_b = lin_init(keys[2], OUTPUT_SIZE, HIDDEN_SIZE)

    return (prep_w, prep_b, dnn_w, dnn_b, dnn_g, dnn_be,
            res_g, res_be, cls_w, cls_b)


def pack_params(params):
    """Host-side prep: transpose weights to (in, out), zero-pad feature dims to 128
    lanes, and concatenate everything into exactly two slabs:
      * w_slab: (W_ROWS, 128)   = [prep_w ; dnn_w[0..L-1] ; cls_w]
      * p_slab: (P_ROWS_PAD,128)= all (1,128) bias / LN-gamma / LN-beta rows
    Every padded lane/row is exactly zero (required by the in-kernel LN scheme)."""
    (prep_w, prep_b, dnn_w, dnn_b, dnn_g, dnn_be,
     res_g, res_be, cls_w, cls_b) = params

    def pad2(a, rows, cols):
        out = jnp.zeros((rows, cols), jnp.float32)
        return out.at[:a.shape[0], :a.shape[1]].set(a)

    def pad_row(v, cols):
        out = jnp.zeros((1, cols), jnp.float32)
        return out.at[0, :v.shape[0]].set(v)

    # ---- weight slab ----
    w_rows = [pad2(prep_w.T, INPUT_SIZE, H_PAD)]                        # (16, 128)
    for l in range(L):
        w_rows.append(pad2(dnn_w[l].T, H_PAD, H_PAD))                   # (128, 128)
    w_rows.append(pad2(cls_w.T, H_PAD, OUT_PAD))                        # (128, 128)
    w_slab = jnp.concatenate(w_rows, axis=0)                            # (656, 128)
    assert w_slab.shape == (W_ROWS, H_PAD)
    if USE_BF16_WEIGHTS:
        w_slab = w_slab.astype(jnp.bfloat16)

    # ---- row-param slab ----
    p_rows = [pad_row(prep_b, H_PAD)]
    p_rows += [pad_row(dnn_b[l], H_PAD) for l in range(L)]
    p_rows += [pad_row(dnn_g[l], H_PAD) for l in range(L)]
    p_rows += [pad_row(dnn_be[l], H_PAD) for l in range(L)]
    p_rows += [pad_row(res_g[r], H_PAD) for r in range(NUM_RES_DNN)]
    p_rows += [pad_row(res_be[r], H_PAD) for r in range(NUM_RES_DNN)]
    p_rows += [pad_row(cls_b, OUT_PAD)]
    p_slab = jnp.concatenate(p_rows, axis=0)                            # (18, 128)
    assert p_slab.shape == (P_ROWS, H_PAD)
    p_slab = jnp.concatenate(
        [p_slab, jnp.zeros((P_ROWS_PAD - P_ROWS, H_PAD), jnp.float32)], axis=0)

    return (w_slab, p_slab)


# ---------------- pure-JAX reference ----------------
def _layernorm_ref(v, gamma, beta):
    mu = jnp.mean(v, axis=-1, keepdims=True)
    var = jnp.mean((v - mu) ** 2, axis=-1, keepdims=True)
    return (v - mu) * jax.lax.rsqrt(var + LN_EPS) * gamma + beta


def reference_forward(x, params):
    (prep_w, prep_b, dnn_w, dnn_b, dnn_g, dnn_be,
     res_g, res_be, cls_w, cls_b) = params
    h = x @ prep_w.T + prep_b
    idx = 0
    for r in range(NUM_RES_DNN):
        sc = h
        for _ in range(NUM_DNN):
            h = h @ dnn_w[idx].T + dnn_b[idx]
            h = jnp.tanh(h)
            h = _layernorm_ref(h, dnn_g[idx], dnn_be[idx])
            idx += 1
        h = jnp.tanh(sc + h)
        h = _layernorm_ref(h, res_g[r], res_be[r])
    return h @ cls_w.T + cls_b


if __name__ == "__main__":
    key = jax.random.PRNGKey(0)
    kx, kp = jax.random.split(key)
    x = jax.random.normal(kx, (BATCH, INPUT_SIZE), jnp.float32)

    params = init_params(kp)
    packed = pack_params(params)

    out = res_dnn_forward(x, packed)
    out = jax.block_until_ready(out)

    ref = reference_forward(x, params)
    assert out.shape == (BATCH, OUTPUT_SIZE)
    tol = 3e-2 if USE_BF16_WEIGHTS else 1e-4
    assert jnp.allclose(out, ref, atol=tol, rtol=tol), "mismatch vs reference"

    print("KERNEL_OK")
</pallas_src>

<mosaic_0001>
module attributes {stable_mosaic.version = 11 : i64} {
  func.func @res_dnn_kernel(%arg0: i32, %arg1: memref<16x16xf32, #tpu.memory_space<vmem>>, %arg2: memref<656x128xf32, #tpu.memory_space<vmem>>, %arg3: memref<24x128xf32, #tpu.memory_space<vmem>>, %arg4: memref<16x128xf32, #tpu.memory_space<vmem>>) attributes {dimension_semantics = [#tpu.dimension_semantics<arbitrary>], iteration_bounds = array<i64: 1>, scalar_prefetch = 0 : i64, scratch_operands = 0 : i64, tpu.core_type = #tpu.core_type<tc>, window_params = [{pipeline_mode = #tpu.pipeline_mode<synchronous>, transform_indices = @transform_0, window_bounds = array<i64: 16, 16>}, {pipeline_mode = #tpu.pipeline_mode<synchronous>, transform_indices = @transform_1, window_bounds = array<i64: 656, 128>}, {pipeline_mode = #tpu.pipeline_mode<synchronous>, transform_indices = @transform_2, window_bounds = array<i64: 24, 128>}, {pipeline_mode = #tpu.pipeline_mode<synchronous>, transform_indices = @transform_3, window_bounds = array<i64: 16, 128>}]} {
    %c0 = arith.constant 0 : index
    %c0_0 = arith.constant 0 : index
    %0 = vector.load %arg1[%c0, %c0_0] : memref<16x16xf32, #tpu.memory_space<vmem>>, vector<16x16xf32>
    %c0_1 = arith.constant 0 : index
    %c0_2 = arith.constant 0 : index
    %1 = vector.load %arg3[%c0_1, %c0_2] : memref<24x128xf32, #tpu.memory_space<vmem>>, vector<24x128xf32>
    %c0_3 = arith.constant 0 : index
    %c0_4 = arith.constant 0 : index
    %2 = vector.load %arg2[%c0_3, %c0_4] : memref<656x128xf32, #tpu.memory_space<vmem>>, vector<16x128xf32>
    %cst = arith.constant dense<0.000000e+00> : vector<16x128xf32>
    %3 = tpu.matmul %0, %2, %cst {dimension_numbers = #tpu.dot_dimension_numbers<[1], [0], [0], [1], [0, 0, 1, 1], [], []>} : vector<16x16xf32>, vector<16x128xf32>, vector<16x128xf32> -> vector<16x128xf32>
    %4 = vector.extract_strided_slice %1 {offsets = [0, 0], sizes = [1, 128], strides = [1, 1]} : vector<24x128xf32> to vector<1x128xf32>
    %5 = vector.broadcast %4 : vector<1x128xf32> to vector<16x128xf32>
    %6 = arith.addf %3, %5 : vector<16x128xf32>
    %c16 = arith.constant 16 : index
    %c0_5 = arith.constant 0 : index
    %7 = vector.load %arg2[%c16, %c0_5] : memref<656x128xf32, #tpu.memory_space<vmem>>, vector<128x128xf32>
    %cst_6 = arith.constant dense<0.000000e+00> : vector<16x128xf32>
    %8 = tpu.matmul %6, %7, %cst_6 {dimension_numbers = #tpu.dot_dimension_numbers<[1], [0], [0], [1], [0, 0, 1, 1], [], []>} : vector<16x128xf32>, vector<128x128xf32>, vector<16x128xf32> -> vector<16x128xf32>
    %9 = vector.extract_strided_slice %1 {offsets = [1, 0], sizes = [1, 128], strides = [1, 1]} : vector<24x128xf32> to vector<1x128xf32>
    %10 = vector.broadcast %9 : vector<1x128xf32> to vector<16x128xf32>
    %11 = arith.addf %8, %10 : vector<16x128xf32>
    %12 = math.tanh %11 : vector<16x128xf32>
    %13 = vector.extract_strided_slice %1 {offsets = [5, 0], sizes = [1, 128], strides = [1, 1]} : vector<24x128xf32> to vector<1x128xf32>
    %14 = vector.extract_strided_slice %1 {offsets = [9, 0], sizes = [1, 128], strides = [1, 1]} : vector<24x128xf32> to vector<1x128xf32>
    %cst_7 = arith.constant dense<0.000000e+00> : vector<16xf32>
    %15 = vector.multi_reduction <add>, %12, %cst_7 [1] : vector<16x128xf32> to vector<16xf32>
    %16 = vector.shape_cast %15 : vector<16xf32> to vector<16x1xf32>
    %17 = arith.mulf %12, %12 : vector<16x128xf32>
    %cst_8 = arith.constant dense<0.000000e+00> : vector<16xf32>
    %18 = vector.multi_reduction <add>, %17, %cst_8 [1] : vector<16x128xf32> to vector<16xf32>
    %19 = vector.shape_cast %18 : vector<16xf32> to vector<16x1xf32>
    %cst_9 = arith.constant 3.125000e-02 : f32
    %20 = vector.broadcast %cst_9 : f32 to vector<16x1xf32>
    %21 = arith.mulf %16, %20 : vector<16x1xf32>
    %cst_10 = arith.constant 3.125000e-02 : f32
    %22 = vector.broadcast %cst_10 : f32 to vector<16x1xf32>
    %23 = arith.mulf %19, %22 : vector<16x1xf32>
    %24 = arith.mulf %21, %21 : vector<16x1xf32>
    %25 = arith.subf %23, %24 : vector<16x1xf32>
    %26 = vector.broadcast %21 : vector<16x1xf32> to vector<16x128xf32>
    %27 = arith.subf %12, %26 : vector<16x128xf32>
    %cst_11 = arith.constant 9.99999974E-6 : f32
    %28 = vector.broadcast %cst_11 : f32 to vector<16x1xf32>
    %29 = arith.addf %25, %28 : vector<16x1xf32>
    %30 = math.rsqrt %29 : vector<16x1xf32>
    %31 = vector.broadcast %30 : vector<16x1xf32> to vector<16x128xf32>
    %32 = arith.mulf %27, %31 : vector<16x128xf32>
    %33 = vector.broadcast %13 : vector<1x128xf32> to vector<16x128xf32>
    %34 = arith.mulf %32, %33 : vector<16x128xf32>
    %35 = vector.broadcast %14 : vector<1x128xf32> to vector<16x128xf32>
    %36 = arith.addf %34, %35 : vector<16x128xf32>
    %c144 = arith.constant 144 : index
    %c0_12 = arith.constant 0 : index
    %37 = vector.load %arg2[%c144, %c0_12] : memref<656x128xf32, #tpu.memory_space<vmem>>, vector<128x128xf32>
    %cst_13 = arith.constant dense<0.000000e+00> : vector<16x128xf32>
    %38 = tpu.matmul %36, %37, %cst_13 {dimension_numbers = #tpu.dot_dimension_numbers<[1], [0], [0], [1], [0, 0, 1, 1], [], []>} : vector<16x128xf32>, vector<128x128xf32>, vector<16x128xf32> -> vector<16x128xf32>
    %39 = vector.extract_strided_slice %1 {offsets = [2, 0], sizes = [1, 128], strides = [1, 1]} : vector<24x128xf32> to vector<1x128xf32>
    %40 = vector.broadcast %39 : vector<1x128xf32> to vector<16x128xf32>
    %41 = arith.addf %38, %40 : vector<16x128xf32>
    %42 = math.tanh %41 : vector<16x128xf32>
    %43 = vector.extract_strided_slice %1 {offsets = [6, 0], sizes = [1, 128], strides = [1, 1]} : vector<24x128xf32> to vector<1x128xf32>
    %44 = vector.extract_strided_slice %1 {offsets = [10, 0], sizes = [1, 128], strides = [1, 1]} : vector<24x128xf32> to vector<1x128xf32>
    %cst_14 = arith.constant dense<0.000000e+00> : vector<16xf32>
    %45 = vector.multi_reduction <add>, %42, %cst_14 [1] : vector<16x128xf32> to vector<16xf32>
    %46 = vector.shape_cast %45 : vector<16xf32> to vector<16x1xf32>
    %47 = arith.mulf %42, %42 : vector<16x128xf32>
    %cst_15 = arith.constant dense<0.000000e+00> : vector<16xf32>
    %48 = vector.multi_reduction <add>, %47, %cst_15 [1] : vector<16x128xf32> to vector<16xf32>
    %49 = vector.shape_cast %48 : vector<16xf32> to vector<16x1xf32>
    %cst_16 = arith.constant 3.125000e-02 : f32
    %50 = vector.broadcast %cst_16 : f32 to vector<16x1xf32>
    %51 = arith.mulf %46, %50 : vector<16x1xf32>
    %cst_17 = arith.constant 3.125000e-02 : f32
    %52 = vector.broadcast %cst_17 : f32 to vector<16x1xf32>
    %53 = arith.mulf %49, %52 : vector<16x1xf32>
    %54 = arith.mulf %51, %51 : vector<16x1xf32>
    %55 = arith.subf %53, %54 : vector<16x1xf32>
    %56 = vector.broadcast %51 : vector<16x1xf32> to vector<16x128xf32>
    %57 = arith.subf %42, %56 : vector<16x128xf32>
    %cst_18 = arith.constant 9.99999974E-6 : f32
    %58 = vector.broadcast %cst_18 : f32 to vector<16x1xf32>
    %59 = arith.addf %55, %58 : vector<16x1xf32>
    %60 = math.rsqrt %59 : vector<16x1xf32>
    %61 = vector.broadcast %60 : vector<16x1xf32> to vector<16x128xf32>
    %62 = arith.mulf %57, %61 : vector<16x128xf32>
    %63 = vector.broadcast %43 : vector<1x128xf32> to vector<16x128xf32>
    %64 = arith.mulf %62, %63 : vector<16x128xf32>
    %65 = vector.broadcast %44 : vector<1x128xf32> to vector<16x128xf32>
    %66 = arith.addf %64, %65 : vector<16x128xf32>
    %67 = arith.addf %6, %66 : vector<16x128xf32>
    %68 = math.tanh %67 : vector<16x128xf32>
    %69 = vector.extract_strided_slice %1 {offsets = [13, 0], sizes = [1, 128], strides = [1, 1]} : vector<24x128xf32> to vector<1x128xf32>
    %70 = vector.extract_strided_slice %1 {offsets = [15, 0], sizes = [1, 128], strides = [1, 1]} : vector<24x128xf32> to vector<1x128xf32>
    %cst_19 = arith.constant dense<0.000000e+00> : vector<16xf32>
    %71 = vector.multi_reduction <add>, %68, %cst_19 [1] : vector<16x128xf32> to vector<16xf32>
    %72 = vector.shape_cast %71 : vector<16xf32> to vector<16x1xf32>
    %73 = arith.mulf %68, %68 : vector<16x128xf32>
    %cst_20 = arith.constant dense<0.000000e+00> : vector<16xf32>
    %74 = vector.multi_reduction <add>, %73, %cst_20 [1] : vector<16x128xf32> to vector<16xf32>
    %75 = vector.shape_cast %74 : vector<16xf32> to vector<16x1xf32>
    %cst_21 = arith.constant 3.125000e-02 : f32
    %76 = vector.broadcast %cst_21 : f32 to vector<16x1xf32>
    %77 = arith.mulf %72, %76 : vector<16x1xf32>
    %cst_22 = arith.constant 3.125000e-02 : f32
    %78 = vector.broadcast %cst_22 : f32 to vector<16x1xf32>
    %79 = arith.mulf %75, %78 : vector<16x1xf32>
    %80 = arith.mulf %77, %77 : vector<16x1xf32>
    %81 = arith.subf %79, %80 : vector<16x1xf32>
    %82 = vector.broadcast %77 : vector<16x1xf32> to vector<16x128xf32>
    %83 = arith.subf %68, %82 : vector<16x128xf32>
    %cst_23 = arith.constant 9.99999974E-6 : f32
    %84 = vector.broadcast %cst_23 : f32 to vector<16x1xf32>
    %85 = arith.addf %81, %84 : vector<16x1xf32>
    %86 = math.rsqrt %85 : vector<16x1xf32>
    %87 = vector.broadcast %86 : vector<16x1xf32> to vector<16x128xf32>
    %88 = arith.mulf %83, %87 : vector<16x128xf32>
    %89 = vector.broadcast %69 : vector<1x128xf32> to vector<16x128xf32>
    %90 = arith.mulf %88, %89 : vector<16x128xf32>
    %91 = vector.broadcast %70 : vector<1x128xf32> to vector<16x128xf32>
    %92 = arith.addf %90, %91 : vector<16x128xf32>
    %c272 = arith.constant 272 : index
    %c0_24 = arith.constant 0 : index
    %93 = vector.load %arg2[%c272, %c0_24] : memref<656x128xf32, #tpu.memory_space<vmem>>, vector<128x128xf32>
    %cst_25 = arith.constant dense<0.000000e+00> : vector<16x128xf32>
    %94 = tpu.matmul %92, %93, %cst_25 {dimension_numbers = #tpu.dot_dimension_numbers<[1], [0], [0], [1], [0, 0, 1, 1], [], []>} : vector<16x128xf32>, vector<128x128xf32>, vector<16x128xf32> -> vector<16x128xf32>
    %95 = vector.extract_strided_slice %1 {offsets = [3, 0], sizes = [1, 128], strides = [1, 1]} : vector<24x128xf32> to vector<1x128xf32>
    %96 = vector.broadcast %95 : vector<1x128xf32> to vector<16x128xf32>
    %97 = arith.addf %94, %96 : vector<16x128xf32>
    %98 = math.tanh %97 : vector<16x128xf32>
    %99 = vector.extract_strided_slice %1 {offsets = [7, 0], sizes = [1, 128], strides = [1, 1]} : vector<24x128xf32> to vector<1x128xf32>
    %100 = vector.extract_strided_slice %1 {offsets = [11, 0], sizes = [1, 128], strides = [1, 1]} : vector<24x128xf32> to vector<1x128xf32>
    %cst_26 = arith.constant dense<0.000000e+00> : vector<16xf32>
    %101 = vector.multi_reduction <add>, %98, %cst_26 [1] : vector<16x128xf32> to vector<16xf32>
    %102 = vector.shape_cast %101 : vector<16xf32> to vector<16x1xf32>
    %103 = arith.mulf %98, %98 : vector<16x128xf32>
    %cst_27 = arith.constant dense<0.000000e+00> : vector<16xf32>
    %104 = vector.multi_reduction <add>, %103, %cst_27 [1] : vector<16x128xf32> to vector<16xf32>
    %105 = vector.shape_cast %104 : vector<16xf32> to vector<16x1xf32>
    %cst_28 = arith.constant 3.125000e-02 : f32
    %106 = vector.broadcast %cst_28 : f32 to vector<16x1xf32>
    %107 = arith.mulf %102, %106 : vector<16x1xf32>
    %cst_29 = arith.constant 3.125000e-02 : f32
    %108 = vector.broadcast %cst_29 : f32 to vector<16x1xf32>
    %109 = arith.mulf %105, %108 : vector<16x1xf32>
    %110 = arith.mulf %107, %107 : vector<16x1xf32>
    %111 = arith.subf %109, %110 : vector<16x1xf32>
    %112 = vector.broadcast %107 : vector<16x1xf32> to vector<16x128xf32>
    %113 = arith.subf %98, %112 : vector<16x128xf32>
    %cst_30 = arith.constant 9.99999974E-6 : f32
    %114 = vector.broadcast %cst_30 : f32 to vector<16x1xf32>
    %115 = arith.addf %111, %114 : vector<16x1xf32>
    %116 = math.rsqrt %115 : vector<16x1xf32>
    %117 = vector.broadcast %116 : vector<16x1xf32> to vector<16x128xf32>
    %118 = arith.mulf %113, %117 : vector<16x128xf32>
    %119 = vector.broadcast %99 : vector<1x128xf32> to vector<16x128xf32>
    %120 = arith.mulf %118, %119 : vector<16x128xf32>
    %121 = vector.broadcast %100 : vector<1x128xf32> to vector<16x128xf32>
    %122 = arith.addf %120, %121 : vector<16x128xf32>
    %c400 = arith.constant 400 : index
    %c0_31 = arith.constant 0 : index
    %123 = vector.load %arg2[%c400, %c0_31] : memref<656x128xf32, #tpu.memory_space<vmem>>, vector<128x128xf32>
    %cst_32 = arith.constant dense<0.000000e+00> : vector<16x128xf32>
    %124 = tpu.matmul %122, %123, %cst_32 {dimension_numbers = #tpu.dot_dimension_numbers<[1], [0], [0], [1], [0, 0, 1, 1], [], []>} : vector<16x128xf32>, vector<128x128xf32>, vector<16x128xf32> -> vector<16x128xf32>
    %125 = vector.extract_strided_slice %1 {offsets = [4, 0], sizes = [1, 128], strides = [1, 1]} : vector<24x128xf32> to vector<1x128xf32>
    %126 = vector.broadcast %125 : vector<1x128xf32> to vector<16x128xf32>
    %127 = arith.addf %124, %126 : vector<16x128xf32>
    %128 = math.tanh %127 : vector<16x128xf32>
    %129 = vector.extract_strided_slice %1 {offsets = [8, 0], sizes = [1, 128], strides = [1, 1]} : vector<24x128xf32> to vector<1x128xf32>
    %130 = vector.extract_strided_slice %1 {offsets = [12, 0], sizes = [1, 128], strides = [1, 1]} : vector<24x128xf32> to vector<1x128xf32>
    %cst_33 = arith.constant dense<0.000000e+00> : vector<16xf32>
    %131 = vector.multi_reduction <add>, %128, %cst_33 [1] : vector<16x128xf32> to vector<16xf32>
    %132 = vector.shape_cast %131 : vector<16xf32> to vector<16x1xf32>
    %133 = arith.mulf %128, %128 : vector<16x128xf32>
    %cst_34 = arith.constant dense<0.000000e+00> : vector<16xf32>
    %134 = vector.multi_reduction <add>, %133, %cst_34 [1] : vector<16x128xf32> to vector<16xf32>
    %135 = vector.shape_cast %134 : vector<16xf32> to vector<16x1xf32>
    %cst_35 = arith.constant 3.125000e-02 : f32
    %136 = vector.broadcast %cst_35 : f32 to vector<16x1xf32>
    %137 = arith.mulf %132, %136 : vector<16x1xf32>
    %cst_36 = arith.constant 3.125000e-02 : f32
    %138 = vector.broadcast %cst_36 : f32 to vector<16x1xf32>
    %139 = arith.mulf %135, %138 : vector<16x1xf32>
    %140 = arith.mulf %137, %137 : vector<16x1xf32>
    %141 = arith.subf %139, %140 : vector<16x1xf32>
    %142 = vector.broadcast %137 : vector<16x1xf32> to vector<16x128xf32>
    %143 = arith.subf %128, %142 : vector<16x128xf32>
    %cst_37 = arith.constant 9.99999974E-6 : f32
    %144 = vector.broadcast %cst_37 : f32 to vector<16x1xf32>
    %145 = arith.addf %141, %144 : vector<16x1xf32>
    %146 = math.rsqrt %145 : vector<16x1xf32>
    %147 = vector.broadcast %146 : vector<16x1xf32> to vector<16x128xf32>
    %148 = arith.mulf %143, %147 : vector<16x128xf32>
    %149 = vector.broadcast %129 : vector<1x128xf32> to vector<16x128xf32>
    %150 = arith.mulf %148, %149 : vector<16x128xf32>
    %151 = vector.broadcast %130 : vector<1x128xf32> to vector<16x128xf32>
    %152 = arith.addf %150, %151 : vector<16x128xf32>
    %153 = arith.addf %92, %152 : vector<16x128xf32>
    %154 = math.tanh %153 : vector<16x128xf32>
    %155 = vector.extract_strided_slice %1 {offsets = [14, 0], sizes = [1, 128], strides = [1, 1]} : vector<24x128xf32> to vector<1x128xf32>
    %156 = vector.extract_strided_slice %1 {offsets = [16, 0], sizes = [1, 128], strides = [1, 1]} : vector<24x128xf32> to vector<1x128xf32>
    %cst_38 = arith.constant dense<0.000000e+00> : vector<16xf32>
    %157 = vector.multi_reduction <add>, %154, %cst_38 [1] : vector<16x128xf32> to vector<16xf32>
    %158 = vector.shape_cast %157 : vector<16xf32> to vector<16x1xf32>
    %159 = arith.mulf %154, %154 : vector<16x128xf32>
    %cst_39 = arith.constant dense<0.000000e+00> : vector<16xf32>
    %160 = vector.multi_reduction <add>, %159, %cst_39 [1] : vector<16x128xf32> to vector<16xf32>
    %161 = vector.shape_cast %160 : vector<16xf32> to vector<16x1xf32>
    %cst_40 = arith.constant 3.125000e-02 : f32
    %162 = vector.broadcast %cst_40 : f32 to vector<16x1xf32>
    %163 = arith.mulf %158, %162 : vector<16x1xf32>
    %cst_41 = arith.constant 3.125000e-02 : f32
    %164 = vector.broadcast %cst_41 : f32 to vector<16x1xf32>
    %165 = arith.mulf %161, %164 : vector<16x1xf32>
    %166 = arith.mulf %163, %163 : vector<16x1xf32>
    %167 = arith.subf %165, %166 : vector<16x1xf32>
    %168 = vector.broadcast %163 : vector<16x1xf32> to vector<16x128xf32>
    %169 = arith.subf %154, %168 : vector<16x128xf32>
    %cst_42 = arith.constant 9.99999974E-6 : f32
    %170 = vector.broadcast %cst_42 : f32 to vector<16x1xf32>
    %171 = arith.addf %167, %170 : vector<16x1xf32>
    %172 = math.rsqrt %171 : vector<16x1xf32>
    %173 = vector.broadcast %172 : vector<16x1xf32> to vector<16x128xf32>
    %174 = arith.mulf %169, %173 : vector<16x128xf32>
    %175 = vector.broadcast %155 : vector<1x128xf32> to vector<16x128xf32>
    %176 = arith.mulf %174, %175 : vector<16x128xf32>
    %177 = vector.broadcast %156 : vector<1x128xf32> to vector<16x128xf32>
    %178 = arith.addf %176, %177 : vector<16x128xf32>
    %c528 = arith.constant 528 : index
    %c0_43 = arith.constant 0 : index
    %179 = vector.load %arg2[%c528, %c0_43] : memref<656x128xf32, #tpu.memory_space<vmem>>, vector<128x128xf32>
    %cst_44 = arith.constant dense<0.000000e+00> : vector<16x128xf32>
    %180 = tpu.matmul %178, %179, %cst_44 {dimension_numbers = #tpu.dot_dimension_numbers<[1], [0], [0], [1], [0, 0, 1, 1], [], []>} : vector<16x128xf32>, vector<128x128xf32>, vector<16x128xf32> -> vector<16x128xf32>
    %181 = vector.extract_strided_slice %1 {offsets = [17, 0], sizes = [1, 128], strides = [1, 1]} : vector<24x128xf32> to vector<1x128xf32>
    %182 = vector.broadcast %181 : vector<1x128xf32> to vector<16x128xf32>
    %183 = arith.addf %180, %182 : vector<16x128xf32>
    %c0_45 = arith.constant 0 : index
    %c0_46 = arith.constant 0 : index
    %184 = vector.load %arg4[%c0_45, %c0_46] : memref<16x128xf32, #tpu.memory_space<vmem>>, vector<16x128xf32>
    tpu.vector_store %arg4[%c0_45, %c0_46], %183 {strides = array<i32>} : memref<16x128xf32, #tpu.memory_space<vmem>>, vector<16x128xf32>,
    return
  }
  func.func @transform_0(%arg0: i32) -> (i32, i32) {
    %c0_i32 = arith.constant 0 : i32
    %c0_i32_0 = arith.constant 0 : i32
    %c0_i32_1 = arith.constant 0 : i32
    return %c0_i32, %c0_i32_0 : i32, i32
  }
  func.func @transform_1(%arg0: i32) -> (i32, i32) {
    %c0_i32 = arith.constant 0 : i32
    %c0_i32_0 = arith.constant 0 : i32
    %c0_i32_1 = arith.constant 0 : i32
    return %c0_i32, %c0_i32_0 : i32, i32
  }
  func.func @transform_2(%arg0: i32) -> (i32, i32) {
    %c0_i32 = arith.constant 0 : i32
    %c0_i32_0 = arith.constant 0 : i32
    %c0_i32_1 = arith.constant 0 : i32
    return %c0_i32, %c0_i32_0 : i32, i32
  }
  func.func @transform_3(%arg0: i32) -> (i32, i32) {
    %c0_i32 = arith.constant 0 : i32
    %c0_i32_0 = arith.constant 0 : i32
    %c0_i32_1 = arith.constant 0 : i32
    return %c0_i32, %c0_i32_0 : i32, i32
  }
}

</mosaic_0001>

<llo_original>
// kernel: tpu_custom_call.1
$region0: #{tpu_custom_call.1}
  #allocation0 [shape = 'u32[]', space=smem, size = 0x4, offset = 0x4, fixed_abs, tag = 'smem constant byte address 0x4 - core index']
  #allocation1 [shape = 'u32[144,128]{1,0:T(1,128)}', space=vmem, size = 0x12000, scoped, tag = 'internal scratch']
  %s0 = inlined_call_operand.hbm [shape: f32[16,16], index: 0, kind: input, shape index: {}]
  %s1 = inlined_call_operand.hbm [shape: f32[656,128], index: 1, kind: input, shape index: {}]
  %s2 = inlined_call_operand.hbm [shape: f32[24,128], index: 2, kind: input, shape index: {}]
  %s3 = inlined_call_operand.hbm [shape: f32[16,128], index: 3, kind: output, shape index: {}]
  %s4 = sld [smem:[#allocation0]]
  $region34: #{tpu_custom_call.1} parent=0
    _
  %s6 = ssub.s32 1, %s4
  %s7 = scalar_select 0, %s6, %s4
  $region1: #{tpu_custom_call.1} parent=0
    #allocation2 [shape = 'u8[8192]{0}', space=vmem, size = 0x2000, scoped, tag = 'input window, operand 0, single buffered']
    #allocation3 [shape = 's32[1]{0}', space=sflag, size = 0x4, scoped, tag = 'scoped memory for tpu_custom_call.1']
    #allocation4 [shape = 's32[1]{0}', space=sflag, size = 0x4, scoped, tag = 'scoped memory for tpu_custom_call.1']
    #allocation5 [shape = 'u8[335872]{0}', space=vmem, size = 0x52000, scoped, tag = 'input window, operand 1, single buffered']
    #allocation6 [shape = 's32[1]{0}', space=sflag, size = 0x4, scoped, tag = 'scoped memory for tpu_custom_call.1']
    #allocation7 [shape = 'u8[12288]{0}', space=vmem, size = 0x3000, scoped, tag = 'input window, operand 2, single buffered']
    #allocation8 [shape = 'u8[8192]{0}', space=vmem, size = 0x2000, scoped, tag = 'output window, operand 0, single buffered']
    %8 = vsyncpa [#allocation3], 0
    %9 = vsyncpa [#allocation6], 0
    %10 = vsyncpa [#allocation4], 0
    // Predicated region
    $region2: #{tpu_custom_call.1} parent=1 // pred_check
      _
    $region3: #{tpu_custom_call.1} parent=1 // pred_check_branch
      %12 = sbr.rel (0) target = $region5
    $region4: #{tpu_custom_call.1} parent=1 // pred_region
      %s14 = ssub.s32 256, 256
      %15 = vsyncadd [#allocation3], %s14
      %s16 = sshll.u32 [#allocation2], 4
      %s17 = int_to_ptr.vmem [resolvable:$true] %s16
      %22 = dma.hbm_to_vmem [thread:$0]  %s0, 256, %s17, [#allocation3], 128, 128, 8
    $region5: #{tpu_custom_call.1} parent=1 // pred_fallthru
      _
    // Predicated region
    $region6: #{tpu_custom_call.1} parent=1 // pred_check
      _
    $region7: #{tpu_custom_call.1} parent=1 // pred_check_branch
      %24 = sbr.rel (0) target = $region9
    $region8: #{tpu_custom_call.1} parent=1 // pred_region
      %s26 = ssub.s32 10496, 10496
      %27 = vsyncadd [#allocation6], %s26
      %s28 = sshll.u32 [#allocation5], 4
      %s29 = int_to_ptr.vmem [resolvable:$true] %s28
      %34 = dma.hbm_to_vmem [thread:$0]  %s1, 10496, %s29, [#allocation6], 128, 128, 8
    $region9: #{tpu_custom_call.1} parent=1 // pred_fallthru
      _
    // Predicated region
    $region10: #{tpu_custom_call.1} parent=1 // pred_check
      _
    $region11: #{tpu_custom_call.1} parent=1 // pred_check_branch
      %36 = sbr.rel (0) target = $region13
    $region12: #{tpu_custom_call.1} parent=1 // pred_region
      %s38 = ssub.s32 384, 384
      %39 = vsyncadd [#allocation6], %s38
      %s40 = sshll.u32 [#allocation7], 4
      %s41 = int_to_ptr.vmem [resolvable:$true] %s40
      %46 = dma.hbm_to_vmem [thread:$0]  %s2, 384, %s41, [#allocation6], 128, 128, 8
    $region13: #{tpu_custom_call.1} parent=1 // pred_fallthru
      _
    // Predicated region
    $region14: #{tpu_custom_call.1} parent=1 // pred_check
      _
    $region15: #{tpu_custom_call.1} parent=1 // pred_check_branch
      %48 = sbr.rel (0) target = $region17
    $region16: #{tpu_custom_call.1} parent=1 // pred_region
      %49 = dma.done [#allocation3], 256
    $region17: #{tpu_custom_call.1} parent=1 // pred_fallthru
      _
    // Predicated region
    $region18: #{tpu_custom_call.1} parent=1 // pred_check
      _
    $region19: #{tpu_custom_call.1} parent=1 // pred_check_branch
      %51 = sbr.rel (0) target = $region21
    $region20: #{tpu_custom_call.1} parent=1 // pred_region
      %52 = dma.done [#allocation6], 10496
    $region21: #{tpu_custom_call.1} parent=1 // pred_fallthru
      _
    // Predicated region
    $region22: #{tpu_custom_call.1} parent=1 // pred_check
      _
    $region23: #{tpu_custom_call.1} parent=1 // pred_check_branch
      %54 = sbr.rel (0) target = $region25
    $region24: #{tpu_custom_call.1} parent=1 // pred_region
      %55 = dma.done [#allocation6], 384
    $region25: #{tpu_custom_call.1} parent=1 // pred_fallthru
      _
    %v56 = vld [vmem:[#allocation2] sm:$0xff]
    %v57 = vld [vmem:[#allocation2 + $0x8] sm:$0xff]
    %v58 = vld [vmem:[#allocation7] sm:$0xff]
    %v59 = vld [vmem:[#allocation7 + $0x8] sm:$0xff]
    %v60 = vld [vmem:[#allocation7 + $0x10] sm:$0xff]
    %v61 = vld [vmem:[#allocation5] sm:$0xff]
    %v62 = vld [vmem:[#allocation5 + $0x8] sm:$0xff]
    %v63 = vlaneseq
    %v64 = vshrl.u32 %v63, 7
    %v65 = vsub.s32 0, %v64
    %v66 = vrot.slane %v58, %v65
    %vm67 = vcmask 130048
    %v69 = vsel %vm67, %v56, 0
    %v72 = vsel %vm67, %v57, 0
    %74 = vmatprep.subr.mxu0 0.0
    %75 = vmatpush1.msra.mxu0 %v61
    %76 = vmatprep.subr.mxu0 0.0
    %77 = vmatpush1.msra.mxu0 %v62
    %78 = vmatprep.subr.mxu0 0.0
    %79 = vmatpush1.msra.mxu0 0.0
    %80 = vmatprep.subr.mxu0 0.0
    %81 = vmatpush1.msra.mxu0 0.0
    %82 = vmatprep.subr.mxu0 0.0
    %83 = vmatpush1.msra.mxu0 0.0
    %84 = vmatprep.subr.mxu0 0.0
    %85 = vmatpush1.msra.mxu0 0.0
    %86 = vmatprep.subr.mxu0 0.0
    %87 = vmatpush1.msra.mxu0 0.0
    %88 = vmatprep.subr.mxu0 0.0
    %89 = vmatpush1.msra.mxu0 0.0
    %90 = vmatprep.subr.mxu0 0.0
    %91 = vmatpush1.msra.mxu0 0.0
    %92 = vmatprep.subr.mxu0 0.0
    %93 = vmatpush1.msra.mxu0 0.0
    %94 = vmatprep.subr.mxu0 0.0
    %95 = vmatpush1.msra.mxu0 0.0
    %96 = vmatprep.subr.mxu0 0.0
    %97 = vmatpush1.msra.mxu0 0.0
    %98 = vmatprep.subr.mxu0 0.0
    %99 = vmatpush1.msra.mxu0 0.0
    %100 = vmatprep.subr.mxu0 0.0
    %101 = vmatpush1.msra.mxu0 0.0
    %102 = vmatprep.subr.mxu0 0.0
    %103 = vmatpush1.msra.mxu0 0.0
    %104 = vmatprep.subr.mxu0 0.0
    %105 = vmatpush1.msra.mxu0 0.0
    %106 = vmatprep.subr.mxu0 0.0
    %107 = vmatpush1.msra.mxu0 0.0
    %108 = vmatprep.subr.mxu0 0.0
    %109 = vmatpush1.msra.mxu0 0.0
    %110 = vmatprep.subr.mxu0 0.0
    %111 = vmatpush1.msra.mxu0 0.0
    %112 = vmatprep.subr.mxu0 0.0
    %113 = vmatpush1.msra.mxu0 0.0
    %114 = vmatprep.subr.mxu0 0.0
    %115 = vmatpush1.msra.mxu0 0.0
    %116 = vmatprep.subr.mxu0 0.0
    %117 = vmatpush1.msra.mxu0 0.0
    %118 = vmatprep.subr.mxu0 0.0
    %119 = vmatpush1.msra.mxu0 0.0
    %120 = vmatprep.subr.mxu0 0.0
    %121 = vmatpush1.msra.mxu0 0.0
    %122 = vmatprep.subr.mxu0 0.0
    %123 = vmatpush1.msra.mxu0 0.0
    %124 = vmatprep.subr.mxu0 0.0
    %125 = vmatpush1.msra.mxu0 0.0
    %126 = vmatprep.subr.mxu0 0.0
    %127 = vmatpush1.msra.mxu0 0.0
    %128 = vmatprep.subr.mxu0 0.0
    %129 = vmatpush1.msra.mxu0 0.0
    %130 = vmatprep.subr.mxu0 0.0
    %131 = vmatpush1.msra.mxu0 0.0
    %132 = vmatprep.subr.mxu0 0.0
    %133 = vmatpush1.msra.mxu0 0.0
    %134 = vmatprep.subr.mxu0 0.0
    %135 = vmatpush1.msra.mxu0 0.0
    %136 = vmatprep.subr.mxu0 0.0
    %137 = vmatpush1.msra.mxu0 0.0
    %138 = vmatprep.mubr.f32.mxu0 0.0
    %139 = vmatmul.mubr.f32.gmra.mrb[0].mxu0 %v69
    %v140 = vpop.f32.mrb[0].mxu0
    %v141 = vadd.f32 %v66, %v140
    %v142 = vpop.f32.mrb[0].mxu0
    %143 = vmatprep.mubr.f32.mxu0 0.0
    %144 = vmatmul.mubr.f32.gmra.mrb[0].mxu0 %v72
    %v145 = vpop.f32.mrb[0].mxu0
    %v146 = vadd.f32 %v66, %v145
    %v147 = vpop.f32.mrb[0].mxu0
    %148 = vdwg.mxu0
    %v149 = vld [vmem:[#allocation5 + $0x10] sm:$0xff]
    %v150 = vld [vmem:[#allocation5 + $0x18] sm:$0xff]
    %v151 = vld [vmem:[#allocation5 + $0x20] sm:$0xff]
    %v152 = vld [vmem:[#allocation5 + $0x28] sm:$0xff]
    %v153 = vld [vmem:[#allocation5 + $0x30] sm:$0xff]
    %v154 = vld [vmem:[#allocation5 + $0x38] sm:$0xff]
    %v155 = vld [vmem:[#allocation5 + $0x40] sm:$0xff]
    %v156 = vld [vmem:[#allocation5 + $0x48] sm:$0xff]
    %v157 = vld [vmem:[#allocation5 + $0x50] sm:$0xff]
    %v158 = vld [vmem:[#allocation5 + $0x58] sm:$0xff]
    %v159 = vld [vmem:[#allocation5 + $0x60] sm:$0xff]
    %v160 = vld [vmem:[#allocation5 + $0x68] sm:$0xff]
    %v161 = vld [vmem:[#allocation5 + $0x70] sm:$0xff]
    %v162 = vld [vmem:[#allocation5 + $0x78] sm:$0xff]
    %v163 = vld [vmem:[#allocation5 + $0x80] sm:$0xff]
    %v164 = vld [vmem:[#allocation5 + $0x88] sm:$0xff]
    %v165 = vlaneseq
    %v166 = vshrl.u32 %v165, 7
    %v167 = vsub.s32 1, %v166
    %v168 = vrot.slane %v58, %v167
    %169 = vmatprep.subr.mxu0 0.0
    %170 = vmatpush1.msra.mxu0 %v149
    %171 = vmatprep.subr.mxu0 0.0
    %172 = vmatpush1.msra.mxu0 %v150
    %173 = vmatprep.subr.mxu0 0.0
    %174 = vmatpush1.msra.mxu0 %v151
    %175 = vmatprep.subr.mxu0 0.0
    %176 = vmatpush1.msra.mxu0 %v152
    %177 = vmatprep.subr.mxu0 0.0
    %178 = vmatpush1.msra.mxu0 %v153
    %179 = vmatprep.subr.mxu0 0.0
    %180 = vmatpush1.msra.mxu0 %v154
    %181 = vmatprep.subr.mxu0 0.0
    %182 = vmatpush1.msra.mxu0 %v155
    %183 = vmatprep.subr.mxu0 0.0
    %184 = vmatpush1.msra.mxu0 %v156
    %185 = vmatprep.subr.mxu0 0.0
    %186 = vmatpush1.msra.mxu0 %v157
    %187 = vmatprep.subr.mxu0 0.0
    %188 = vmatpush1.msra.mxu0 %v158
    %189 = vmatprep.subr.mxu0 0.0
    %190 = vmatpush1.msra.mxu0 %v159
    %191 = vmatprep.subr.mxu0 0.0
    %192 = vmatpush1.msra.mxu0 %v160
    %193 = vmatprep.subr.mxu0 0.0
    %194 = vmatpush1.msra.mxu0 %v161
    %195 = vmatprep.subr.mxu0 0.0
    %196 = vmatpush1.msra.mxu0 %v162
    %197 = vmatprep.subr.mxu0 0.0
    %198 = vmatpush1.msra.mxu0 %v163
    %199 = vmatprep.subr.mxu0 0.0
    %200 = vmatpush1.msra.mxu0 %v164
    %201 = vmatprep.subr.mxu0 0.0
    %202 = vmatpush1.msra.mxu0 0.0
    %203 = vmatprep.subr.mxu0 0.0
    %204 = vmatpush1.msra.mxu0 0.0
    %205 = vmatprep.subr.mxu0 0.0
    %206 = vmatpush1.msra.mxu0 0.0
    %207 = vmatprep.subr.mxu0 0.0
    %208 = vmatpush1.msra.mxu0 0.0
    %209 = vmatprep.subr.mxu0 0.0
    %210 = vmatpush1.msra.mxu0 0.0
    %211 = vmatprep.subr.mxu0 0.0
    %212 = vmatpush1.msra.mxu0 0.0
    %213 = vmatprep.subr.mxu0 0.0
    %214 = vmatpush1.msra.mxu0 0.0
    %215 = vmatprep.subr.mxu0 0.0
    %216 = vmatpush1.msra.mxu0 0.0
    %217 = vmatprep.subr.mxu0 0.0
    %218 = vmatpush1.msra.mxu0 0.0
    %219 = vmatprep.subr.mxu0 0.0
    %220 = vmatpush1.msra.mxu0 0.0
    %221 = vmatprep.subr.mxu0 0.0
    %222 = vmatpush1.msra.mxu0 0.0
    %223 = vmatprep.subr.mxu0 0.0
    %224 = vmatpush1.msra.mxu0 0.0
    %225 = vmatprep.subr.mxu0 0.0
    %226 = vmatpush1.msra.mxu0 0.0
    %227 = vmatprep.subr.mxu0 0.0
    %228 = vmatpush1.msra.mxu0 0.0
    %229 = vmatprep.subr.mxu0 0.0
    %230 = vmatpush1.msra.mxu0 0.0
    %231 = vmatprep.subr.mxu0 0.0
    %232 = vmatpush1.msra.mxu0 0.0
    %233 = vmatprep.mubr.f32.mxu0 0.0
    %234 = vmatmul.mubr.f32.gmra.mrb[0].mxu0 %v141
    %v235 = vpop.f32.mrb[0].mxu0
    %v236 = vadd.f32 %v168, %v235
    %v237 = vpop.f32.mrb[0].mxu0
    %238 = vmatprep.mubr.f32.mxu0 0.0
    %239 = vmatmul.mubr.f32.gmra.mrb[0].mxu0 %v146
    %v240 = vpop.f32.mrb[0].mxu0
    %v241 = vadd.f32 %v168, %v240
    %v242 = vpop.f32.mrb[0].mxu0
    %243 = vdwg.mxu0
    %v244 = vtanh.pop %v236
    %v245 = vtanh.pop %v241
    %246 = vadd.xlane.f32.xlu0 %v244
    %v247 = vpop.xlane.xlu0 %246
    %248 = vadd.xlane.f32.xlu0 %v245
    %v249 = vpop.xlane.xlu0 %248
    %v250 = vmul.f32 %v244, %v244
    %v251 = vmul.f32 %v245, %v245
    %252 = vadd.xlane.f32.xlu0 %v250
    %v253 = vpop.xlane.xlu0 %252
    %254 = vadd.xlane.f32.xlu0 %v251
    %v255 = vpop.xlane.xlu0 %254
    %v256 = vmul.f32 %v247, 0.03125
    %v257 = vmul.f32 %v249, 0.03125
    %v258 = vmul.f32 %v253, 0.03125
    %v259 = vmul.f32 %v255, 0.03125
    %v260 = vmul.f32 %v256, %v256
    %v261 = vmul.f32 %v257, %v257
    %v262 = vsub.f32 %v258, %v260
    %v263 = vsub.f32 %v259, %v261
    %v264 = vsub.f32 %v244, %v256
    %v265 = vsub.f32 %v245, %v257
    %v266 = vadd.f32 %v262, 1e-05
    %v267 = vadd.f32 %v263, 1e-05
    %v268 = vrsqrt.pop %v266
    %v269 = vrsqrt.pop %v267
    %v270 = vmul.f32 %v264, %v268
    %v271 = vmul.f32 %v265, %v269
    %v272 = vlaneseq
    %v273 = vshrl.u32 %v272, 7
    %v274 = vsub.s32 5, %v273
    %v275 = vrot.slane %v58, %v274
    %v276 = vmul.f32 %v270, %v275
    %v277 = vmul.f32 %v271, %v275
    %v278 = vlaneseq
    %v279 = vshrl.u32 %v278, 7
    %v280 = vsub.s32 1, %v279
    %v281 = vrot.slane %v59, %v280
    %v282 = vadd.f32 %v276, %v281
    %v283 = vadd.f32 %v277, %v281
    %v284 = vld [vmem:[#allocation5 + $0x90] sm:$0xff]
    %v285 = vld [vmem:[#allocation5 + $0x98] sm:$0xff]
    %v286 = vld [vmem:[#allocation5 + $0xa0] sm:$0xff]
    %v287 = vld [vmem:[#allocation5 + $0xa8] sm:$0xff]
    %v288 = vld [vmem:[#allocation5 + $0xb0] sm:$0xff]
    %v289 = vld [vmem:[#allocation5 + $0xb8] sm:$0xff]
    %v290 = vld [vmem:[#allocation5 + $0xc0] sm:$0xff]
    %v291 = vld [vmem:[#allocation5 + $0xc8] sm:$0xff]
    %v292 = vld [vmem:[#allocation5 + $0xd0] sm:$0xff]
    %v293 = vld [vmem:[#allocation5 + $0xd8] sm:$0xff]
    %v294 = vld [vmem:[#allocation5 + $0xe0] sm:$0xff]
    %v295 = vld [vmem:[#allocation5 + $0xe8] sm:$0xff]
    %v296 = vld [vmem:[#allocation5 + $0xf0] sm:$0xff]
    %v297 = vld [vmem:[#allocation5 + $0xf8] sm:$0xff]
    %v298 = vld [vmem:[#allocation5 + $0x100] sm:$0xff]
    %v299 = vld [vmem:[#allocation5 + $0x108] sm:$0xff]
    %v300 = vlaneseq
    %v301 = vshrl.u32 %v300, 7
    %v302 = vsub.s32 2, %v301
    %v303 = vrot.slane %v58, %v302
    %304 = vmatprep.subr.mxu0 0.0
    %305 = vmatpush1.msra.mxu0 %v284
    %306 = vmatprep.subr.mxu0 0.0
    %307 = vmatpush1.msra.mxu0 %v285
    %308 = vmatprep.subr.mxu0 0.0
    %309 = vmatpush1.msra.mxu0 %v286
    %310 = vmatprep.subr.mxu0 0.0
    %311 = vmatpush1.msra.mxu0 %v287
    %312 = vmatprep.subr.mxu0 0.0
    %313 = vmatpush1.msra.mxu0 %v288
    %314 = vmatprep.subr.mxu0 0.0
    %315 = vmatpush1.msra.mxu0 %v289
    %316 = vmatprep.subr.mxu0 0.0
    %317 = vmatpush1.msra.mxu0 %v290
    %318 = vmatprep.subr.mxu0 0.0
    %319 = vmatpush1.msra.mxu0 %v291
    %320 = vmatprep.subr.mxu0 0.0
    %321 = vmatpush1.msra.mxu0 %v292
    %322 = vmatprep.subr.mxu0 0.0
    %323 = vmatpush1.msra.mxu0 %v293
    %324 = vmatprep.subr.mxu0 0.0
    %325 = vmatpush1.msra.mxu0 %v294
    %326 = vmatprep.subr.mxu0 0.0
    %327 = vmatpush1.msra.mxu0 %v295
    %328 = vmatprep.subr.mxu0 0.0
    %329 = vmatpush1.msra.mxu0 %v296
    %330 = vmatprep.subr.mxu0 0.0
    %331 = vmatpush1.msra.mxu0 %v297
    %332 = vmatprep.subr.mxu0 0.0
    %333 = vmatpush1.msra.mxu0 %v298
    %334 = vmatprep.subr.mxu0 0.0
    %335 = vmatpush1.msra.mxu0 %v299
    %336 = vmatprep.subr.mxu0 0.0
    %337 = vmatpush1.msra.mxu0 0.0
    %338 = vmatprep.subr.mxu0 0.0
    %339 = vmatpush1.msra.mxu0 0.0
    %340 = vmatprep.subr.mxu0 0.0
    %341 = vmatpush1.msra.mxu0 0.0
    %342 = vmatprep.subr.mxu0 0.0
    %343 = vmatpush1.msra.mxu0 0.0
    %344 = vmatprep.subr.mxu0 0.0
    %345 = vmatpush1.msra.mxu0 0.0
    %346 = vmatprep.subr.mxu0 0.0
    %347 = vmatpush1.msra.mxu0 0.0
    %348 = vmatprep.subr.mxu0 0.0
    %349 = vmatpush1.msra.mxu0 0.0
    %350 = vmatprep.subr.mxu0 0.0
    %351 = vmatpush1.msra.mxu0 0.0
    %352 = vmatprep.subr.mxu0 0.0
    %353 = vmatpush1.msra.mxu0 0.0
    %354 = vmatprep.subr.mxu0 0.0
    %355 = vmatpush1.msra.mxu0 0.0
    %356 = vmatprep.subr.mxu0 0.0
    %357 = vmatpush1.msra.mxu0 0.0
    %358 = vmatprep.subr.mxu0 0.0
    %359 = vmatpush1.msra.mxu0 0.0
    %360 = vmatprep.subr.mxu0 0.0
    %361 = vmatpush1.msra.mxu0 0.0
    %362 = vmatprep.subr.mxu0 0.0
    %363 = vmatpush1.msra.mxu0 0.0
    %364 = vmatprep.subr.mxu0 0.0
    %365 = vmatpush1.msra.mxu0 0.0
    %366 = vmatprep.subr.mxu0 0.0
    %367 = vmatpush1.msra.mxu0 0.0
    %368 = vmatprep.mubr.f32.mxu0 0.0
    %369 = vmatmul.mubr.f32.gmra.mrb[0].mxu0 %v282
    %v370 = vpop.f32.mrb[0].mxu0
    %v371 = vadd.f32 %v303, %v370
    %v372 = vpop.f32.mrb[0].mxu0
    %373 = vmatprep.mubr.f32.mxu0 0.0
    %374 = vmatmul.mubr.f32.gmra.mrb[0].mxu0 %v283
    %v375 = vpop.f32.mrb[0].mxu0
    %v376 = vadd.f32 %v303, %v375
    %v377 = vpop.f32.mrb[0].mxu0
    %378 = vdwg.mxu0
    %v379 = vtanh.pop %v371
    %v380 = vtanh.pop %v376
    %381 = vadd.xlane.f32.xlu0 %v379
    %v382 = vpop.xlane.xlu0 %381
    %383 = vadd.xlane.f32.xlu0 %v380
    %v384 = vpop.xlane.xlu0 %383
    %v385 = vmul.f32 %v379, %v379
    %v386 = vmul.f32 %v380, %v380
    %387 = vadd.xlane.f32.xlu0 %v385
    %v388 = vpop.xlane.xlu0 %387
    %389 = vadd.xlane.f32.xlu0 %v386
    %v390 = vpop.xlane.xlu0 %389
    %v391 = vmul.f32 %v382, 0.03125
    %v392 = vmul.f32 %v384, 0.03125
    %v393 = vmul.f32 %v388, 0.03125
    %v394 = vmul.f32 %v390, 0.03125
    %v395 = vmul.f32 %v391, %v391
    %v396 = vmul.f32 %v392, %v392
    %v397 = vsub.f32 %v393, %v395
    %v398 = vsub.f32 %v394, %v396
    %v399 = vsub.f32 %v379, %v391
    %v400 = vsub.f32 %v380, %v392
    %v401 = vadd.f32 %v397, 1e-05
    %v402 = vadd.f32 %v398, 1e-05
    %v403 = vrsqrt.pop %v401
    %v404 = vrsqrt.pop %v402
    %v405 = vmul.f32 %v399, %v403
    %v406 = vmul.f32 %v400, %v404
    %v407 = vlaneseq
    %v408 = vshrl.u32 %v407, 7
    %v409 = vsub.s32 6, %v408
    %v410 = vrot.slane %v58, %v409
    %v411 = vmul.f32 %v405, %v410
    %v412 = vmul.f32 %v406, %v410
    %v413 = vlaneseq
    %v414 = vshrl.u32 %v413, 7
    %v415 = vsub.s32 2, %v414
    %v416 = vrot.slane %v59, %v415
    %v417 = vadd.f32 %v411, %v416
    %v418 = vadd.f32 %v412, %v416
    %v419 = vadd.f32 %v141, %v417
    %v420 = vadd.f32 %v146, %v418
    %v421 = vtanh.pop %v419
    %v422 = vtanh.pop %v420
    %423 = vadd.xlane.f32.xlu0 %v421
    %v424 = vpop.xlane.xlu0 %423
    %425 = vadd.xlane.f32.xlu0 %v422
    %v426 = vpop.xlane.xlu0 %425
    %v427 = vmul.f32 %v421, %v421
    %v428 = vmul.f32 %v422, %v422
    %429 = vadd.xlane.f32.xlu0 %v427
    %v430 = vpop.xlane.xlu0 %429
    %431 = vadd.xlane.f32.xlu0 %v428
    %v432 = vpop.xlane.xlu0 %431
    %v433 = vmul.f32 %v424, 0.03125
    %v434 = vmul.f32 %v426, 0.03125
    %v435 = vmul.f32 %v430, 0.03125
    %v436 = vmul.f32 %v432, 0.03125
    %v437 = vmul.f32 %v433, %v433
    %v438 = vmul.f32 %v434, %v434
    %v439 = vsub.f32 %v435, %v437
    %v440 = vsub.f32 %v436, %v438
    %v441 = vsub.f32 %v421, %v433
    %v442 = vsub.f32 %v422, %v434
    %v443 = vadd.f32 %v439, 1e-05
    %v444 = vadd.f32 %v440, 1e-05
    %v445 = vrsqrt.pop %v443
    %v446 = vrsqrt.pop %v444
    %v447 = vmul.f32 %v441, %v445
    %v448 = vmul.f32 %v442, %v446
    %v449 = vlaneseq
    %v450 = vshrl.u32 %v449, 7
    %v451 = vsub.s32 5, %v450
    %v452 = vrot.slane %v59, %v451
    %v453 = vmul.f32 %v447, %v452
    %v454 = vmul.f32 %v448, %v452
    %v455 = vlaneseq
    %v456 = vshrl.u32 %v455, 7
    %v457 = vsub.s32 7, %v456
    %v458 = vrot.slane %v59, %v457
    %v459 = vadd.f32 %v453, %v458
    %v460 = vadd.f32 %v454, %v458
    %v461 = vld [vmem:[#allocation5 + $0x110] sm:$0xff]
    %v462 = vld [vmem:[#allocation5 + $0x118] sm:$0xff]
    %v463 = vld [vmem:[#allocation5 + $0x120] sm:$0xff]
    %v464 = vld [vmem:[#allocation5 + $0x128] sm:$0xff]
    %v465 = vld [vmem:[#allocation5 + $0x130] sm:$0xff]
    %v466 = vld [vmem:[#allocation5 + $0x138] sm:$0xff]
    %v467 = vld [vmem:[#allocation5 + $0x140] sm:$0xff]
    %v468 = vld [vmem:[#allocation5 + $0x148] sm:$0xff]
    %v469 = vld [vmem:[#allocation5 + $0x150] sm:$0xff]
    %v470 = vld [vmem:[#allocation5 + $0x158] sm:$0xff]
    %v471 = vld [vmem:[#allocation5 + $0x160] sm:$0xff]
    %v472 = vld [vmem:[#allocation5 + $0x168] sm:$0xff]
    %v473 = vld [vmem:[#allocation5 + $0x170] sm:$0xff]
    %v474 = vld [vmem:[#allocation5 + $0x178] sm:$0xff]
    %v475 = vld [vmem:[#allocation5 + $0x180] sm:$0xff]
    %v476 = vld [vmem:[#allocation5 + $0x188] sm:$0xff]
    %v477 = vlaneseq
    %v478 = vshrl.u32 %v477, 7
    %v479 = vsub.s32 3, %v478
    %v480 = vrot.slane %v58, %v479
    %481 = vmatprep.subr.mxu0 0.0
    %482 = vmatpush1.msra.mxu0 %v461
    %483 = vmatprep.subr.mxu0 0.0
    %484 = vmatpush1.msra.mxu0 %v462
    %485 = vmatprep.subr.mxu0 0.0
    %486 = vmatpush1.msra.mxu0 %v463
    %487 = vmatprep.subr.mxu0 0.0
    %488 = vmatpush1.msra.mxu0 %v464
    %489 = vmatprep.subr.mxu0 0.0
    %490 = vmatpush1.msra.mxu0 %v465
    %491 = vmatprep.subr.mxu0 0.0
    %492 = vmatpush1.msra.mxu0 %v466
    %493 = vmatprep.subr.mxu0 0.0
    %494 = vmatpush1.msra.mxu0 %v467
    %495 = vmatprep.subr.mxu0 0.0
    %496 = vmatpush1.msra.mxu0 %v468
    %497 = vmatprep.subr.mxu0 0.0
    %498 = vmatpush1.msra.mxu0 %v469
    %499 = vmatprep.subr.mxu0 0.0
    %500 = vmatpush1.msra.mxu0 %v470
    %501 = vmatprep.subr.mxu0 0.0
    %502 = vmatpush1.msra.mxu0 %v471
    %503 = vmatprep.subr.mxu0 0.0
    %504 = vmatpush1.msra.mxu0 %v472
    %505 = vmatprep.subr.mxu0 0.0
    %506 = vmatpush1.msra.mxu0 %v473
    %507 = vmatprep.subr.mxu0 0.0
    %508 = vmatpush1.msra.mxu0 %v474
    %509 = vmatprep.subr.mxu0 0.0
    %510 = vmatpush1.msra.mxu0 %v475
    %511 = vmatprep.subr.mxu0 0.0
    %512 = vmatpush1.msra.mxu0 %v476
    %513 = vmatprep.subr.mxu0 0.0
    %514 = vmatpush1.msra.mxu0 0.0
    %515 = vmatprep.subr.mxu0 0.0
    %516 = vmatpush1.msra.mxu0 0.0
    %517 = vmatprep.subr.mxu0 0.0
    %518 = vmatpush1.msra.mxu0 0.0
    %519 = vmatprep.subr.mxu0 0.0
    %520 = vmatpush1.msra.mxu0 0.0
    %521 = vmatprep.subr.mxu0 0.0
    %522 = vmatpush1.msra.mxu0 0.0
    %523 = vmatprep.subr.mxu0 0.0
    %524 = vmatpush1.msra.mxu0 0.0
    %525 = vmatprep.subr.mxu0 0.0
    %526 = vmatpush1.msra.mxu0 0.0
    %527 = vmatprep.subr.mxu0 0.0
    %528 = vmatpush1.msra.mxu0 0.0
    %529 = vmatprep.subr.mxu0 0.0
    %530 = vmatpush1.msra.mxu0 0.0
    %531 = vmatprep.subr.mxu0 0.0
    %532 = vmatpush1.msra.mxu0 0.0
    %533 = vmatprep.subr.mxu0 0.0
    %534 = vmatpush1.msra.mxu0 0.0
    %535 = vmatprep.subr.mxu0 0.0
    %536 = vmatpush1.msra.mxu0 0.0
    %537 = vmatprep.subr.mxu0 0.0
    %538 = vmatpush1.msra.mxu0 0.0
    %539 = vmatprep.subr.mxu0 0.0
    %540 = vmatpush1.msra.mxu0 0.0
    %541 = vmatprep.subr.mxu0 0.0
    %542 = vmatpush1.msra.mxu0 0.0
    %543 = vmatprep.subr.mxu0 0.0
    %544 = vmatpush1.msra.mxu0 0.0
    %545 = vmatprep.mubr.f32.mxu0 0.0
    %546 = vmatmul.mubr.f32.gmra.mrb[0].mxu0 %v459
    %v547 = vpop.f32.mrb[0].mxu0
    %v548 = vadd.f32 %v480, %v547
    %v549 = vpop.f32.mrb[0].mxu0
    %550 = vmatprep.mubr.f32.mxu0 0.0
    %551 = vmatmul.mubr.f32.gmra.mrb[0].mxu0 %v460
    %v552 = vpop.f32.mrb[0].mxu0
    %v553 = vadd.f32 %v480, %v552
    %v554 = vpop.f32.mrb[0].mxu0
    %555 = vdwg.mxu0
    %v556 = vtanh.pop %v548
    %v557 = vtanh.pop %v553
    %558 = vadd.xlane.f32.xlu0 %v556
    %v559 = vpop.xlane.xlu0 %558
    %560 = vadd.xlane.f32.xlu0 %v557
    %v561 = vpop.xlane.xlu0 %560
    %v562 = vmul.f32 %v556, %v556
    %v563 = vmul.f32 %v557, %v557
    %564 = vadd.xlane.f32.xlu0 %v562
    %v565 = vpop.xlane.xlu0 %564
    %566 = vadd.xlane.f32.xlu0 %v563
    %v567 = vpop.xlane.xlu0 %566
    %v568 = vmul.f32 %v559, 0.03125
    %v569 = vmul.f32 %v561, 0.03125
    %v570 = vmul.f32 %v565, 0.03125
    %v571 = vmul.f32 %v567, 0.03125
    %v572 = vmul.f32 %v568, %v568
    %v573 = vmul.f32 %v569, %v569
    %v574 = vsub.f32 %v570, %v572
    %v575 = vsub.f32 %v571, %v573
    %v576 = vsub.f32 %v556, %v568
    %v577 = vsub.f32 %v557, %v569
    %v578 = vadd.f32 %v574, 1e-05
    %v579 = vadd.f32 %v575, 1e-05
    %v580 = vrsqrt.pop %v578
    %v581 = vrsqrt.pop %v579
    %v582 = vmul.f32 %v576, %v580
    %v583 = vmul.f32 %v577, %v581
    %v584 = vlaneseq
    %v585 = vshrl.u32 %v584, 7
    %v586 = vsub.s32 7, %v585
    %v587 = vrot.slane %v58, %v586
    %v588 = vmul.f32 %v582, %v587
    %v589 = vmul.f32 %v583, %v587
    %v590 = vlaneseq
    %v591 = vshrl.u32 %v590, 7
    %v592 = vsub.s32 3, %v591
    %v593 = vrot.slane %v59, %v592
    %v594 = vadd.f32 %v588, %v593
    %v595 = vadd.f32 %v589, %v593
    %v596 = vld [vmem:[#allocation5 + $0x190] sm:$0xff]
    %v597 = vld [vmem:[#allocation5 + $0x198] sm:$0xff]
    %v598 = vld [vmem:[#allocation5 + $0x1a0] sm:$0xff]
    %v599 = vld [vmem:[#allocation5 + $0x1a8] sm:$0xff]
    %v600 = vld [vmem:[#allocation5 + $0x1b0] sm:$0xff]
    %v601 = vld [vmem:[#allocation5 + $0x1b8] sm:$0xff]
    %v602 = vld [vmem:[#allocation5 + $0x1c0] sm:$0xff]
    %v603 = vld [vmem:[#allocation5 + $0x1c8] sm:$0xff]
    %v604 = vld [vmem:[#allocation5 + $0x1d0] sm:$0xff]
    %v605 = vld [vmem:[#allocation5 + $0x1d8] sm:$0xff]
    %v606 = vld [vmem:[#allocation5 + $0x1e0] sm:$0xff]
    %v607 = vld [vmem:[#allocation5 + $0x1e8] sm:$0xff]
    %v608 = vld [vmem:[#allocation5 + $0x1f0] sm:$0xff]
    %v609 = vld [vmem:[#allocation5 + $0x1f8] sm:$0xff]
    %v610 = vld [vmem:[#allocation5 + $0x200] sm:$0xff]
    %v611 = vld [vmem:[#allocation5 + $0x208] sm:$0xff]
    %v612 = vlaneseq
    %v613 = vshrl.u32 %v612, 7
    %v614 = vsub.s32 4, %v613
    %v615 = vrot.slane %v58, %v614
    %616 = vmatprep.subr.mxu0 0.0
    %617 = vmatpush1.msra.mxu0 %v596
    %618 = vmatprep.subr.mxu0 0.0
    %619 = vmatpush1.msra.mxu0 %v597
    %620 = vmatprep.subr.mxu0 0.0
    %621 = vmatpush1.msra.mxu0 %v598
    %622 = vmatprep.subr.mxu0 0.0
    %623 = vmatpush1.msra.mxu0 %v599
    %624 = vmatprep.subr.mxu0 0.0
    %625 = vmatpush1.msra.mxu0 %v600
    %626 = vmatprep.subr.mxu0 0.0
    %627 = vmatpush1.msra.mxu0 %v601
    %628 = vmatprep.subr.mxu0 0.0
    %629 = vmatpush1.msra.mxu0 %v602
    %630 = vmatprep.subr.mxu0 0.0
    %631 = vmatpush1.msra.mxu0 %v603
    %632 = vmatprep.subr.mxu0 0.0
    %633 = vmatpush1.msra.mxu0 %v604
    %634 = vmatprep.subr.mxu0 0.0
    %635 = vmatpush1.msra.mxu0 %v605
    %636 = vmatprep.subr.mxu0 0.0
    %637 = vmatpush1.msra.mxu0 %v606
    %638 = vmatprep.subr.mxu0 0.0
    %639 = vmatpush1.msra.mxu0 %v607
    %640 = vmatprep.subr.mxu0 0.0
    %641 = vmatpush1.msra.mxu0 %v608
    %642 = vmatprep.subr.mxu0 0.0
    %643 = vmatpush1.msra.mxu0 %v609
    %644 = vmatprep.subr.mxu0 0.0
    %645 = vmatpush1.msra.mxu0 %v610
    %646 = vmatprep.subr.mxu0 0.0
    %647 = vmatpush1.msra.mxu0 %v611
    %648 = vmatprep.subr.mxu0 0.0
    %649 = vmatpush1.msra.mxu0 0.0
    %650 = vmatprep.subr.mxu0 0.0
    %651 = vmatpush1.msra.mxu0 0.0
    %652 = vmatprep.subr.mxu0 0.0
    %653 = vmatpush1.msra.mxu0 0.0
    %654 = vmatprep.subr.mxu0 0.0
    %655 = vmatpush1.msra.mxu0 0.0
    %656 = vmatprep.subr.mxu0 0.0
    %657 = vmatpush1.msra.mxu0 0.0
    %658 = vmatprep.subr.mxu0 0.0
    %659 = vmatpush1.msra.mxu0 0.0
    %660 = vmatprep.subr.mxu0 0.0
    %661 = vmatpush1.msra.mxu0 0.0
    %662 = vmatprep.subr.mxu0 0.0
    %663 = vmatpush1.msra.mxu0 0.0
    %664 = vmatprep.subr.mxu0 0.0
    %665 = vmatpush1.msra.mxu0 0.0
    %666 = vmatprep.subr.mxu0 0.0
    %667 = vmatpush1.msra.mxu0 0.0
    %668 = vmatprep.subr.mxu0 0.0
    %669 = vmatpush1.msra.mxu0 0.0
    %670 = vmatprep.subr.mxu0 0.0
    %671 = vmatpush1.msra.mxu0 0.0
    %672 = vmatprep.subr.mxu0 0.0
    %673 = vmatpush1.msra.mxu0 0.0
    %674 = vmatprep.subr.mxu0 0.0
    %675 = vmatpush1.msra.mxu0 0.0
    %676 = vmatprep.subr.mxu0 0.0
    %677 = vmatpush1.msra.mxu0 0.0
    %678 = vmatprep.subr.mxu0 0.0
    %679 = vmatpush1.msra.mxu0 0.0
    %680 = vmatprep.mubr.f32.mxu0 0.0
    %681 = vmatmul.mubr.f32.gmra.mrb[0].mxu0 %v594
    %v682 = vpop.f32.mrb[0].mxu0
    %v683 = vadd.f32 %v615, %v682
    %v684 = vpop.f32.mrb[0].mxu0
    %685 = vmatprep.mubr.f32.mxu0 0.0
    %686 = vmatmul.mubr.f32.gmra.mrb[0].mxu0 %v595
    %v687 = vpop.f32.mrb[0].mxu0
    %v688 = vadd.f32 %v615, %v687
    %v689 = vpop.f32.mrb[0].mxu0
    %690 = vdwg.mxu0
    %v691 = vtanh.pop %v683
    %v692 = vtanh.pop %v688
    %693 = vadd.xlane.f32.xlu0 %v691
    %v694 = vpop.xlane.xlu0 %693
    %695 = vadd.xlane.f32.xlu0 %v692
    %v696 = vpop.xlane.xlu0 %695
    %v697 = vmul.f32 %v691, %v691
    %v698 = vmul.f32 %v692, %v692
    %699 = vadd.xlane.f32.xlu0 %v697
    %v700 = vpop.xlane.xlu0 %699
    %701 = vadd.xlane.f32.xlu0 %v698
    %v702 = vpop.xlane.xlu0 %701
    %v703 = vmul.f32 %v694, 0.03125
    %v704 = vmul.f32 %v696, 0.03125
    %v705 = vmul.f32 %v700, 0.03125
    %v706 = vmul.f32 %v702, 0.03125
    %v707 = vmul.f32 %v703, %v703
    %v708 = vmul.f32 %v704, %v704
    %v709 = vsub.f32 %v705, %v707
    %v710 = vsub.f32 %v706, %v708
    %v711 = vsub.f32 %v691, %v703
    %v712 = vsub.f32 %v692, %v704
    %v713 = vadd.f32 %v709, 1e-05
    %v714 = vadd.f32 %v710, 1e-05
    %v715 = vrsqrt.pop %v713
    %v716 = vrsqrt.pop %v714
    %v717 = vmul.f32 %v711, %v715
    %v718 = vmul.f32 %v712, %v716
    %v719 = vlaneseq
    %v720 = vshrl.u32 %v719, 7
    %v721 = vsub.s32 0, %v720
    %v722 = vrot.slane %v59, %v721
    %v723 = vmul.f32 %v717, %v722
    %v724 = vmul.f32 %v718, %v722
    %v725 = vlaneseq
    %v726 = vshrl.u32 %v725, 7
    %v727 = vsub.s32 4, %v726
    %v728 = vrot.slane %v59, %v727
    %v729 = vadd.f32 %v723, %v728
    %v730 = vadd.f32 %v724, %v728
    %v731 = vadd.f32 %v459, %v729
    %v732 = vadd.f32 %v460, %v730
    %v733 = vtanh.pop %v731
    %v734 = vtanh.pop %v732
    %735 = vadd.xlane.f32.xlu0 %v733
    %v736 = vpop.xlane.xlu0 %735
    %737 = vadd.xlane.f32.xlu0 %v734
    %v738 = vpop.xlane.xlu0 %737
    %v739 = vmul.f32 %v733, %v733
    %v740 = vmul.f32 %v734, %v734
    %741 = vadd.xlane.f32.xlu0 %v739
    %v742 = vpop.xlane.xlu0 %741
    %743 = vadd.xlane.f32.xlu0 %v740
    %v744 = vpop.xlane.xlu0 %743
    %v745 = vmul.f32 %v736, 0.03125
    %v746 = vmul.f32 %v738, 0.03125
    %v747 = vmul.f32 %v742, 0.03125
    %v748 = vmul.f32 %v744, 0.03125
    %v749 = vmul.f32 %v745, %v745
    %v750 = vmul.f32 %v746, %v746
    %v751 = vsub.f32 %v747, %v749
    %v752 = vsub.f32 %v748, %v750
    %v753 = vsub.f32 %v733, %v745
    %v754 = vsub.f32 %v734, %v746
    %v755 = vadd.f32 %v751, 1e-05
    %v756 = vadd.f32 %v752, 1e-05
    %v757 = vrsqrt.pop %v755
    %v758 = vrsqrt.pop %v756
    %v759 = vmul.f32 %v753, %v757
    %v760 = vmul.f32 %v754, %v758
    %v761 = vlaneseq
    %v762 = vshrl.u32 %v761, 7
    %v763 = vsub.s32 6, %v762
    %v764 = vrot.slane %v59, %v763
    %v765 = vmul.f32 %v759, %v764
    %v766 = vmul.f32 %v760, %v764
    %v767 = vlaneseq
    %v768 = vshrl.u32 %v767, 7
    %v769 = vsub.s32 0, %v768
    %v770 = vrot.slane %v60, %v769
    %v771 = vadd.f32 %v765, %v770
    %v772 = vadd.f32 %v766, %v770
    %v773 = vld [vmem:[#allocation5 + $0x210] sm:$0xff]
    %v774 = vld [vmem:[#allocation5 + $0x218] sm:$0xff]
    %v775 = vld [vmem:[#allocation5 + $0x220] sm:$0xff]
    %v776 = vld [vmem:[#allocation5 + $0x228] sm:$0xff]
    %v777 = vld [vmem:[#allocation5 + $0x230] sm:$0xff]
    %v778 = vld [vmem:[#allocation5 + $0x238] sm:$0xff]
    %v779 = vld [vmem:[#allocation5 + $0x240] sm:$0xff]
    %v780 = vld [vmem:[#allocation5 + $0x248] sm:$0xff]
    %v781 = vld [vmem:[#allocation5 + $0x250] sm:$0xff]
    %v782 = vld [vmem:[#allocation5 + $0x258] sm:$0xff]
    %v783 = vld [vmem:[#allocation5 + $0x260] sm:$0xff]
    %v784 = vld [vmem:[#allocation5 + $0x268] sm:$0xff]
    %v785 = vld [vmem:[#allocation5 + $0x270] sm:$0xff]
    %v786 = vld [vmem:[#allocation5 + $0x278] sm:$0xff]
    %v787 = vld [vmem:[#allocation5 + $0x280] sm:$0xff]
    %v788 = vld [vmem:[#allocation5 + $0x288] sm:$0xff]
    %v789 = vlaneseq
    %v790 = vshrl.u32 %v789, 7
    %v791 = vsub.s32 1, %v790
    %v792 = vrot.slane %v60, %v791
    %793 = vmatprep.subr.mxu0 0.0
    %794 = vmatpush1.msra.mxu0 %v773
    %795 = vmatprep.subr.mxu0 0.0
    %796 = vmatpush1.msra.mxu0 %v774
    %797 = vmatprep.subr.mxu0 0.0
    %798 = vmatpush1.msra.mxu0 %v775
    %799 = vmatprep.subr.mxu0 0.0
    %800 = vmatpush1.msra.mxu0 %v776
    %801 = vmatprep.subr.mxu0 0.0
    %802 = vmatpush1.msra.mxu0 %v777
    %803 = vmatprep.subr.mxu0 0.0
    %804 = vmatpush1.msra.mxu0 %v778
    %805 = vmatprep.subr.mxu0 0.0
    %806 = vmatpush1.msra.mxu0 %v779
    %807 = vmatprep.subr.mxu0 0.0
    %808 = vmatpush1.msra.mxu0 %v780
    %809 = vmatprep.subr.mxu0 0.0
    %810 = vmatpush1.msra.mxu0 %v781
    %811 = vmatprep.subr.mxu0 0.0
    %812 = vmatpush1.msra.mxu0 %v782
    %813 = vmatprep.subr.mxu0 0.0
    %814 = vmatpush1.msra.mxu0 %v783
    %815 = vmatprep.subr.mxu0 0.0
    %816 = vmatpush1.msra.mxu0 %v784
    %817 = vmatprep.subr.mxu0 0.0
    %818 = vmatpush1.msra.mxu0 %v785
    %819 = vmatprep.subr.mxu0 0.0
    %820 = vmatpush1.msra.mxu0 %v786
    %821 = vmatprep.subr.mxu0 0.0
    %822 = vmatpush1.msra.mxu0 %v787
    %823 = vmatprep.subr.mxu0 0.0
    %824 = vmatpush1.msra.mxu0 %v788
    %825 = vmatprep.subr.mxu0 0.0
    %826 = vmatpush1.msra.mxu0 0.0
    %827 = vmatprep.subr.mxu0 0.0
    %828 = vmatpush1.msra.mxu0 0.0
    %829 = vmatprep.subr.mxu0 0.0
    %830 = vmatpush1.msra.mxu0 0.0
    %831 = vmatprep.subr.mxu0 0.0
    %832 = vmatpush1.msra.mxu0 0.0
    %833 = vmatprep.subr.mxu0 0.0
    %834 = vmatpush1.msra.mxu0 0.0
    %835 = vmatprep.subr.mxu0 0.0
    %836 = vmatpush1.msra.mxu0 0.0
    %837 = vmatprep.subr.mxu0 0.0
    %838 = vmatpush1.msra.mxu0 0.0
    %839 = vmatprep.subr.mxu0 0.0
    %840 = vmatpush1.msra.mxu0 0.0
    %841 = vmatprep.subr.mxu0 0.0
    %842 = vmatpush1.msra.mxu0 0.0
    %843 = vmatprep.subr.mxu0 0.0
    %844 = vmatpush1.msra.mxu0 0.0
    %845 = vmatprep.subr.mxu0 0.0
    %846 = vmatpush1.msra.mxu0 0.0
    %847 = vmatprep.subr.mxu0 0.0
    %848 = vmatpush1.msra.mxu0 0.0
    %849 = vmatprep.subr.mxu0 0.0
    %850 = vmatpush1.msra.mxu0 0.0
    %851 = vmatprep.subr.mxu0 0.0
    %852 = vmatpush1.msra.mxu0 0.0
    %853 = vmatprep.subr.mxu0 0.0
    %854 = vmatpush1.msra.mxu0 0.0
    %855 = vmatprep.subr.mxu0 0.0
    %856 = vmatpush1.msra.mxu0 0.0
    %857 = vmatprep.mubr.f32.mxu0 0.0
    %858 = vmatmul.mubr.f32.gmra.mrb[0].mxu0 %v771
    %v859 = vpop.f32.mrb[0].mxu0
    %v860 = vadd.f32 %v792, %v859
    %v861 = vpop.f32.mrb[0].mxu0
    %862 = vmatprep.mubr.f32.mxu0 0.0
    %863 = vmatmul.mubr.f32.gmra.mrb[0].mxu0 %v772
    %v864 = vpop.f32.mrb[0].mxu0
    %v865 = vadd.f32 %v792, %v864
    %v866 = vpop.f32.mrb[0].mxu0
    %867 = vdwg.mxu0
    %868 = vst [vmem:[#allocation8] sm:$0xff] %v860
    %869 = vst [vmem:[#allocation8 + $0x8] sm:$0xff] %v865
    // Predicated region
    $region26: #{tpu_custom_call.1} parent=1 // pred_check
      _
    $region27: #{tpu_custom_call.1} parent=1 // pred_check_branch
      %871 = sbr.rel (0) target = $region29
    $region28: #{tpu_custom_call.1} parent=1 // pred_region
      %s873 = ssub.s32 256, 256
      %874 = vsyncadd [#allocation4], %s873
      %s875 = sshll.u32 [#allocation8], 4
      %s876 = int_to_ptr.vmem [resolvable:$true] %s875
      %881 = dma.vmem_to_hbm [thread:$0]  %s876, 256, %s3, [#allocation4], 128, 128, 8
    $region29: #{tpu_custom_call.1} parent=1 // pred_fallthru
      _
    // Predicated region
    $region30: #{tpu_custom_call.1} parent=1 // pred_check
      _
    $region31: #{tpu_custom_call.1} parent=1 // pred_check_branch
      %883 = sbr.rel (0) target = $region33
    $region32: #{tpu_custom_call.1} parent=1 // pred_region
      %884 = dma.done [#allocation4], 256
    $region33: #{tpu_custom_call.1} parent=1 // pred_fallthru
      _
    %885 = vsyncpa [#allocation3], 1
    %886 = vsyncpa [#allocation6], 1
    %887 = vsyncpa [#allocation4], 1

</llo_original>
